<compile_context>
chip_gen: v6e
topology: v6e:2x2x1
jax: 0.10.0
libtpu: 0.0.40
codegen_flags: <defaults>
</compile_context>

<pallas_src>
import jax
import jax.numpy as jnp
from jax.experimental import pallas as pl
from jax.experimental.pallas import tpu as pltpu


CAT, CAT_PAD = 320, 384          # concat width, padded to 3*128 lanes
HID, HID_PAD = 64, 128           # fc1 hidden width, padded to 128 lanes
KIN = 8                          # packed scalar inputs [E,F,G,H,I,0,0,0]


def _round_up(x, m):
    return ((x + m - 1) // m) * m


def mlp5_kernel(x_ref, w5_ref, b5_ref, w1_ref, b1_ref, w2_ref, b2_ref, o_ref):
    """One batch tile of the forward pass.

    x_ref  : (TB, 8)          packed inputs [E, F, G, H, I, 0, 0, 0]
    w5_ref : (8, 384)         block-structured branch weights (zero-padded)
    b5_ref : (1, 384)         concatenated branch biases (zero-padded)
    w1_ref : (384, 128)       fc1 weight (in, out), zero-padded
    b1_ref : (1, 128)         fc1 bias, zero-padded
    w2_ref : (128, O_pad)     fc2 weight, zero-padded rows / lanes
    b2_ref : (1, O_pad)       fc2 bias, zero-padded
    o_ref  : (TB, O_pad)      lane-dense padded output
    """
    mxu_dtype = w1_ref.dtype                       # f32 or bf16 (set host-side)
    x = x_ref[...].astype(mxu_dtype)               # (TB, 8)

    # Stage 1: five Linear(1,64)+ReLU branches + concat == one MXU matmul.
    x_all = jnp.dot(x, w5_ref[...], preferred_element_type=jnp.float32)
    x_all = jnp.maximum(x_all + b5_ref[...], 0.0)                     # (TB, 384)

    # Stage 2: fc1 + ReLU (f32 accumulation; bias/ReLU on VPU in f32).
    h = jnp.dot(x_all.astype(mxu_dtype), w1_ref[...],
                preferred_element_type=jnp.float32)
    h = jnp.maximum(h + b1_ref[...], 0.0)                             # (TB, 128)

    # Stage 3: fc2 (no activation), lane-dense padded output.
    out = jnp.dot(h.astype(mxu_dtype), w2_ref[...],
                  preferred_element_type=jnp.float32) + b2_ref[...]
    o_ref[...] = out.astype(o_ref.dtype)


def pack_params(params, mxu_dtype=jnp.float32):
    """Host-side, one-time repacking of natural-shape params for the kernel."""
    out_dim = params["w2"].shape[1]
    out_pad = _round_up(max(out_dim, 128), 128)

    # Block-structured branch weight: row j covers output columns 64j:64(j+1).
    w5blk = jnp.zeros((KIN, CAT_PAD), jnp.float32)
    for j in range(5):
        w5blk = w5blk.at[j, 64 * j:64 * (j + 1)].set(params["w5"][j])
    b5flat = jnp.zeros((1, CAT_PAD), jnp.float32).at[:, :CAT].set(
        params["b5"].reshape(1, CAT))

    # fc1 padded: extra input rows and extra output lanes are zero, so the
    # padded hidden columns come out as relu(0) = 0 (exact).
    w1p = jnp.zeros((CAT_PAD, HID_PAD), jnp.float32).at[:CAT, :HID].set(
        params["w1"])
    b1p = jnp.zeros((1, HID_PAD), jnp.float32).at[:, :HID].set(
        params["b1"].reshape(1, HID))

    # fc2 padded: zero rows for the padded hidden lanes, zero output lanes.
    w2p = jnp.zeros((HID_PAD, out_pad), jnp.float32).at[:HID, :out_dim].set(
        params["w2"])
    b2p = jnp.zeros((1, out_pad), jnp.float32).at[:, :out_dim].set(
        params["b2"])

    return {
        "w5blk": w5blk.astype(mxu_dtype),
        "b5flat": b5flat,                              # biases stay f32 (VPU)
        "w1p": w1p.astype(mxu_dtype),
        "b1p": b1p,
        "w2p": w2p.astype(mxu_dtype),
        "b2p": b2p,
        "out_dim": out_dim,
        "out_pad": out_pad,
    }


def mlp5_forward(packed, A, B, C, D, E, F, G, H, I, *, block_batch=512):
    """Wrapper matching MLPModel5.forward(A,...,I).  A..D are unused."""
    del A, B, C, D
    batch = E.shape[0]

    # Pure glue: pack the five scalar inputs and pad K to 8.
    x5 = jnp.concatenate([E, F, G, H, I], axis=1)              # (batch, 5)
    x8 = jnp.pad(x5, ((0, 0), (0, KIN - 5)))                   # (batch, 8)

    # Batch tiling: TB rows per grid step (8-aligned), pad batch to TB multiple.
    tb = min(block_batch, _round_up(batch, 8))
    padded_b = _round_up(batch, tb)
    if padded_b != batch:
        x8 = jnp.pad(x8, ((0, padded_b - batch), (0, 0)))

    out_dim = packed["out_dim"]
    out_pad = packed["out_pad"]
    grid = (padded_b // tb,)

    weight_bytes = sum(
        packed[k].size * packed[k].dtype.itemsize
        for k in ("w5blk", "b5flat", "w1p", "b1p", "w2p", "b2p"))
    cost = pl.CostEstimate(
        flops=2 * padded_b * (KIN * CAT_PAD + CAT_PAD * HID_PAD
                              + HID_PAD * out_pad),
        transcendentals=0,
        bytes_accessed=x8.size * x8.dtype.itemsize
        + padded_b * out_pad * 4 + weight_bytes,
    )

    out = pl.pallas_call(
        mlp5_kernel,
        out_shape=jax.ShapeDtypeStruct((padded_b, out_pad), jnp.float32),
        grid=grid,
        in_specs=[
            pl.BlockSpec((tb, KIN), lambda i: (i, 0)),        # batch-tiled input
            pl.BlockSpec((KIN, CAT_PAD), lambda i: (0, 0)),   # weights: resident,
            pl.BlockSpec((1, CAT_PAD), lambda i: (0, 0)),     # DMA'd once
            pl.BlockSpec((CAT_PAD, HID_PAD), lambda i: (0, 0)),
            pl.BlockSpec((1, HID_PAD), lambda i: (0, 0)),
            pl.BlockSpec((HID_PAD, out_pad), lambda i: (0, 0)),
            pl.BlockSpec((1, out_pad), lambda i: (0, 0)),
        ],
        out_specs=pl.BlockSpec((tb, out_pad), lambda i: (i, 0)),
        compiler_params=pltpu.CompilerParams(
            dimension_semantics=("parallel",)),
        cost_estimate=cost,
    )(x8, packed["w5blk"], packed["b5flat"], packed["w1p"], packed["b1p"],
      packed["w2p"], packed["b2p"])

    return out[:batch, :out_dim]


def init_params(key, output_dim):
    """Deterministic synthetic parameters, natural shapes, stored as (in, out)."""
    ks = jax.random.split(key, 6)

    def uniform(k, shape, fan_in):
        bound = 1.0 / jnp.sqrt(float(fan_in))
        return jax.random.uniform(k, shape, jnp.float32, -bound, bound)

    return {
        "w5": uniform(ks[0], (5, 64), 1),          # row j = fc_{E..I}1 weight
        "b5": uniform(ks[1], (5, 64), 1),
        "w1": uniform(ks[2], (CAT, HID), CAT),
        "b1": uniform(ks[3], (HID,), CAT),
        "w2": uniform(ks[4], (HID, output_dim), HID),
        "b2": uniform(ks[5], (output_dim,), HID),
    }


def reference_forward(params, E, F, G, H, I):
    """Pure-JAX reference mirroring the torch forward."""
    def branch(x, j):
        return jax.nn.relu(x @ params["w5"][j:j + 1, :] + params["b5"][j])
    x_all = jnp.concatenate(
        [branch(x, j) for j, x in enumerate([E, F, G, H, I])], axis=1)
    h = jax.nn.relu(x_all @ params["w1"] + params["b1"])
    return h @ params["w2"] + params["b2"]


if __name__ == "__main__":
    key = jax.random.PRNGKey(0)
    batch, input_dim, output_dim = 8, 1, 8

    k_par, *k_in = jax.random.split(key, 10)
    params = init_params(k_par, output_dim)

    # Nine inputs, each (batch, 1); A..D are unused by the forward pass.
    A, B, C, D, E, F, G, H, I = (
        jax.random.normal(k, (batch, input_dim), jnp.float32) for k in k_in
    )

    ref = reference_forward(params, E, F, G, H, I)

    # 1) f32 MXU operands: bit-level-faithful to the reference.
    packed_f32 = pack_params(params, mxu_dtype=jnp.float32)
    out = jax.block_until_ready(
        mlp5_forward(packed_f32, A, B, C, D, E, F, G, H, I))
    assert out.shape == (batch, output_dim)
    assert jnp.allclose(out, ref, atol=1e-5, rtol=1e-5), "f32 mismatch vs reference"

    # 2) bf16 MXU operands (recommended on v6e/v7x): f32 accumulation, f32 VPU
    #    bias/ReLU; only the dot operands are bf16.
    packed_bf16 = pack_params(params, mxu_dtype=jnp.bfloat16)
    out_bf16 = jax.block_until_ready(
        mlp5_forward(packed_bf16, A, B, C, D, E, F, G, H, I))
    assert out_bf16.shape == (batch, output_dim)
    assert jnp.allclose(out_bf16, ref, atol=5e-2, rtol=5e-2), "bf16 mismatch vs reference"

    # 3) Multi-tile grid + ragged batch (exercises batch padding / pipelining).
    kb = jax.random.split(jax.random.PRNGKey(1), 5)
    E2, F2, G2, H2, I2 = (jax.random.normal(k, (200, 1), jnp.float32) for k in kb)
    ref2 = reference_forward(params, E2, F2, G2, H2, I2)
    out2 = jax.block_until_ready(
        mlp5_forward(packed_f32, None, None, None, None,
                     E2, F2, G2, H2, I2, block_batch=64))
    assert out2.shape == (200, output_dim)
    assert jnp.allclose(out2, ref2, atol=1e-5, rtol=1e-5), "multi-tile mismatch"

    print("KERNEL_OK")
</pallas_src>

<mosaic_0001>
module attributes {stable_mosaic.version = 11 : i64} {
  func.func @mlp5_kernel(%arg0: i32, %arg1: memref<8x8xf32, #tpu.memory_space<vmem>>, %arg2: memref<8x384xf32, #tpu.memory_space<vmem>>, %arg3: memref<1x384xf32, #tpu.memory_space<vmem>>, %arg4: memref<384x128xf32, #tpu.memory_space<vmem>>, %arg5: memref<1x128xf32, #tpu.memory_space<vmem>>, %arg6: memref<128x128xf32, #tpu.memory_space<vmem>>, %arg7: memref<1x128xf32, #tpu.memory_space<vmem>>, %arg8: memref<8x128xf32, #tpu.memory_space<vmem>>) attributes {dimension_semantics = [#tpu.dimension_semantics<parallel>], iteration_bounds = array<i64: 1>, scalar_prefetch = 0 : i64, scratch_operands = 0 : i64, tpu.core_type = #tpu.core_type<tc>, window_params = [{transform_indices = @transform_0, window_bounds = array<i64: 8, 8>}, {pipeline_mode = #tpu.pipeline_mode<synchronous>, transform_indices = @transform_1, window_bounds = array<i64: 8, 384>}, {pipeline_mode = #tpu.pipeline_mode<synchronous>, transform_indices = @transform_2, window_bounds = array<i64: 1, 384>}, {pipeline_mode = #tpu.pipeline_mode<synchronous>, transform_indices = @transform_3, window_bounds = array<i64: 384, 128>}, {pipeline_mode = #tpu.pipeline_mode<synchronous>, transform_indices = @transform_4, window_bounds = array<i64: 1, 128>}, {pipeline_mode = #tpu.pipeline_mode<synchronous>, transform_indices = @transform_5, window_bounds = array<i64: 128, 128>}, {pipeline_mode = #tpu.pipeline_mode<synchronous>, transform_indices = @transform_6, window_bounds = array<i64: 1, 128>}, {transform_indices = @transform_7, window_bounds = array<i64: 8, 128>}]} {
    %c0 = arith.constant 0 : index
    %c0_0 = arith.constant 0 : index
    %0 = vector.load %arg1[%c0, %c0_0] : memref<8x8xf32, #tpu.memory_space<vmem>>, vector<8x8xf32>
    %c0_1 = arith.constant 0 : index
    %c0_2 = arith.constant 0 : index
    %1 = vector.load %arg2[%c0_1, %c0_2] : memref<8x384xf32, #tpu.memory_space<vmem>>, vector<8x384xf32>
    %cst = arith.constant dense<0.000000e+00> : vector<8x384xf32>
    %2 = tpu.matmul %0, %1, %cst {dimension_numbers = #tpu.dot_dimension_numbers<[1], [0], [0], [1], [0, 0, 1, 1], [], []>} : vector<8x8xf32>, vector<8x384xf32>, vector<8x384xf32> -> vector<8x384xf32>
    %c0_3 = arith.constant 0 : index
    %c0_4 = arith.constant 0 : index
    %3 = vector.load %arg3[%c0_3, %c0_4] : memref<1x384xf32, #tpu.memory_space<vmem>>, vector<1x384xf32>
    %4 = vector.broadcast %3 : vector<1x384xf32> to vector<8x384xf32>
    %5 = arith.addf %2, %4 : vector<8x384xf32>
    %cst_5 = arith.constant 0.000000e+00 : f32
    %6 = vector.broadcast %cst_5 : f32 to vector<8x384xf32>
    %7 = arith.maximumf %5, %6 : vector<8x384xf32>
    %c0_6 = arith.constant 0 : index
    %c0_7 = arith.constant 0 : index
    %8 = vector.load %arg4[%c0_6, %c0_7] : memref<384x128xf32, #tpu.memory_space<vmem>>, vector<384x128xf32>
    %cst_8 = arith.constant dense<0.000000e+00> : vector<8x128xf32>
    %9 = tpu.matmul %7, %8, %cst_8 {dimension_numbers = #tpu.dot_dimension_numbers<[1], [0], [0], [1], [0, 0, 1, 1], [], []>} : vector<8x384xf32>, vector<384x128xf32>, vector<8x128xf32> -> vector<8x128xf32>
    %c0_9 = arith.constant 0 : index
    %c0_10 = arith.constant 0 : index
    %10 = vector.load %arg5[%c0_9, %c0_10] : memref<1x128xf32, #tpu.memory_space<vmem>>, vector<1x128xf32>
    %11 = vector.broadcast %10 : vector<1x128xf32> to vector<8x128xf32>
    %12 = arith.addf %9, %11 : vector<8x128xf32>
    %cst_11 = arith.constant 0.000000e+00 : f32
    %13 = vector.broadcast %cst_11 : f32 to vector<8x128xf32>
    %14 = arith.maximumf %12, %13 : vector<8x128xf32>
    %c0_12 = arith.constant 0 : index
    %c0_13 = arith.constant 0 : index
    %15 = vector.load %arg6[%c0_12, %c0_13] : memref<128x128xf32, #tpu.memory_space<vmem>>, vector<128x128xf32>
    %cst_14 = arith.constant dense<0.000000e+00> : vector<8x128xf32>
    %16 = tpu.matmul %14, %15, %cst_14 {dimension_numbers = #tpu.dot_dimension_numbers<[1], [0], [0], [1], [0, 0, 1, 1], [], []>} : vector<8x128xf32>, vector<128x128xf32>, vector<8x128xf32> -> vector<8x128xf32>
    %c0_15 = arith.constant 0 : index
    %c0_16 = arith.constant 0 : index
    %17 = vector.load %arg7[%c0_15, %c0_16] : memref<1x128xf32, #tpu.memory_space<vmem>>, vector<1x128xf32>
    %18 = vector.broadcast %17 : vector<1x128xf32> to vector<8x128xf32>
    %19 = arith.addf %16, %18 : vector<8x128xf32>
    %c0_17 = arith.constant 0 : index
    %c0_18 = arith.constant 0 : index
    %20 = vector.load %arg8[%c0_17, %c0_18] : memref<8x128xf32, #tpu.memory_space<vmem>>, vector<8x128xf32>
    tpu.vector_store %arg8[%c0_17, %c0_18], %19 {strides = array<i32>} : memref<8x128xf32, #tpu.memory_space<vmem>>, vector<8x128xf32>,
    return
  }
  func.func @transform_0(%arg0: i32) -> (i32, i32) {
    %c0_i32 = arith.constant 0 : i32
    %c0_i32_0 = arith.constant 0 : i32
    return %arg0, %c0_i32 : i32, i32
  }
  func.func @transform_1(%arg0: i32) -> (i32, i32) {
    %c0_i32 = arith.constant 0 : i32
    %c0_i32_0 = arith.constant 0 : i32
    %c0_i32_1 = arith.constant 0 : i32
    return %c0_i32, %c0_i32_0 : i32, i32
  }
  func.func @transform_2(%arg0: i32) -> (i32, i32) {
    %c0_i32 = arith.constant 0 : i32
    %c0_i32_0 = arith.constant 0 : i32
    %c0_i32_1 = arith.constant 0 : i32
    return %c0_i32, %c0_i32_0 : i32, i32
  }
  func.func @transform_3(%arg0: i32) -> (i32, i32) {
    %c0_i32 = arith.constant 0 : i32
    %c0_i32_0 = arith.constant 0 : i32
    %c0_i32_1 = arith.constant 0 : i32
    return %c0_i32, %c0_i32_0 : i32, i32
  }
  func.func @transform_4(%arg0: i32) -> (i32, i32) {
    %c0_i32 = arith.constant 0 : i32
    %c0_i32_0 = arith.constant 0 : i32
    %c0_i32_1 = arith.constant 0 : i32
    return %c0_i32, %c0_i32_0 : i32, i32
  }
  func.func @transform_5(%arg0: i32) -> (i32, i32) {
    %c0_i32 = arith.constant 0 : i32
    %c0_i32_0 = arith.constant 0 : i32
    %c0_i32_1 = arith.constant 0 : i32
    return %c0_i32, %c0_i32_0 : i32, i32
  }
  func.func @transform_6(%arg0: i32) -> (i32, i32) {
    %c0_i32 = arith.constant 0 : i32
    %c0_i32_0 = arith.constant 0 : i32
    %c0_i32_1 = arith.constant 0 : i32
    return %c0_i32, %c0_i32_0 : i32, i32
  }
  func.func @transform_7(%arg0: i32) -> (i32, i32) {
    %c0_i32 = arith.constant 0 : i32
    %c0_i32_0 = arith.constant 0 : i32
    return %arg0, %c0_i32 : i32, i32
  }
}

</mosaic_0001>

<llo_original>
// kernel: tpu_custom_call.1
$region0: #{tpu_custom_call.1}
  #allocation0 [shape = 'u32[]', space=smem, size = 0x4, offset = 0x4, fixed_abs, tag = 'smem constant byte address 0x4 - core index']
  #allocation1 [shape = 'u32[144,128]{1,0:T(1,128)}', space=vmem, size = 0x12000, scoped, tag = 'internal scratch']
  %s0 = inlined_call_operand.hbm [shape: f32[8,8], index: 0, kind: input, shape index: {}]
  %s1 = inlined_call_operand.hbm [shape: f32[8,384], index: 1, kind: input, shape index: {}]
  %s2 = inlined_call_operand.vmem [shape: f32[1,384], index: 2, kind: input, shape index: {}]
  %s3 = inlined_call_operand.hbm [shape: f32[384,128], index: 3, kind: input, shape index: {}]
  %s4 = inlined_call_operand.vmem [shape: f32[1,128], index: 4, kind: input, shape index: {}]
  %s5 = inlined_call_operand.hbm [shape: f32[128,128], index: 5, kind: input, shape index: {}]
  %s6 = inlined_call_operand.vmem [shape: f32[1,128], index: 6, kind: input, shape index: {}]
  %s7 = inlined_call_operand.hbm [shape: f32[8,128], index: 7, kind: output, shape index: {}]
  %s8 = sld [smem:[#allocation0]]
  $region54: #{tpu_custom_call.1} parent=0
    _
  %s10 = ssub.s32 1, %s8
  %s11 = scalar_select 0, %s10, %s8
  $region1: #{tpu_custom_call.1} parent=0
    #allocation2 [shape = 'u8[4096]{0}', space=vmem, size = 0x1000, scoped, tag = 'input window, operand 0, single buffered']
    #allocation3 [shape = 's32[1]{0}', space=sflag, size = 0x4, scoped, tag = 'scoped memory for tpu_custom_call.1']
    #allocation4 [shape = 's32[1]{0}', space=sflag, size = 0x4, scoped, tag = 'scoped memory for tpu_custom_call.1']
    #allocation5 [shape = 'u8[12288]{0}', space=vmem, size = 0x3000, scoped, tag = 'input window, operand 1, single buffered']
    #allocation6 [shape = 's32[1]{0}', space=sflag, size = 0x4, scoped, tag = 'scoped memory for tpu_custom_call.1']
    #allocation7 [shape = 'u8[196608]{0}', space=vmem, size = 0x30000, scoped, tag = 'input window, operand 3, single buffered']
    #allocation8 [shape = 'u8[65536]{0}', space=vmem, size = 0x10000, scoped, tag = 'input window, operand 5, single buffered']
    #allocation9 [shape = 's32[1]{0}', space=sflag, size = 0x4, scoped, tag = 'scoped memory for tpu_custom_call.1']
    #allocation10 [shape = 'u8[4096]{0}', space=vmem, size = 0x1000, scoped, tag = 'output window, operand 0, single buffered']
    %12 = vsyncpa [#allocation3], 0
    %13 = vsyncpa [#allocation6], 0
    %14 = vsyncpa [#allocation9], 0
    %15 = vsyncpa [#allocation4], 0
    // Predicated region
    $region2: #{tpu_custom_call.1} parent=1 // pred_check
      _
    $region3: #{tpu_custom_call.1} parent=1 // pred_check_branch
      %17 = sbr.rel (0) target = $region5
    $region4: #{tpu_custom_call.1} parent=1 // pred_region
      %s19 = ssub.s32 128, 128
      %20 = vsyncadd [#allocation3], %s19
      %s22 = sshll.u32 [#allocation2], 4
      %s23 = int_to_ptr.vmem [resolvable:$true] %s22
      %25 = dma.hbm_to_vmem [thread:$0]  %s0, 128, %s23, [#allocation3]
    $region5: #{tpu_custom_call.1} parent=1 // pred_fallthru
      _
    // Predicated region
    $region6: #{tpu_custom_call.1} parent=1 // pred_check
      _
    $region7: #{tpu_custom_call.1} parent=1 // pred_check_branch
      %27 = sbr.rel (0) target = $region9
    $region8: #{tpu_custom_call.1} parent=1 // pred_region
      %s29 = ssub.s32 384, 384
      %30 = vsyncadd [#allocation6], %s29
      %s32 = sshll.u32 [#allocation5], 4
      %s33 = int_to_ptr.vmem [resolvable:$true] %s32
      %35 = dma.hbm_to_vmem [thread:$0]  %s1, 384, %s33, [#allocation6]
    $region9: #{tpu_custom_call.1} parent=1 // pred_fallthru
      _
    // Predicated region
    $region10: #{tpu_custom_call.1} parent=1 // pred_check
      _
    $region11: #{tpu_custom_call.1} parent=1 // pred_check_branch
      %37 = sbr.rel (0) target = $region13
    $region12: #{tpu_custom_call.1} parent=1 // pred_region
      _
    $region13: #{tpu_custom_call.1} parent=1 // pred_fallthru
      _
    // Predicated region
    $region14: #{tpu_custom_call.1} parent=1 // pred_check
      _
    $region15: #{tpu_custom_call.1} parent=1 // pred_check_branch
      %39 = sbr.rel (0) target = $region17
    $region16: #{tpu_custom_call.1} parent=1 // pred_region
      %s41 = ssub.s32 6144, 6144
      %42 = vsyncadd [#allocation6], %s41
      %s43 = sshll.u32 [#allocation7], 4
      %s44 = int_to_ptr.vmem [resolvable:$true] %s43
      %49 = dma.hbm_to_vmem [thread:$0]  %s3, 6144, %s44, [#allocation6], 128, 128, 8
    $region17: #{tpu_custom_call.1} parent=1 // pred_fallthru
      _
    // Predicated region
    $region18: #{tpu_custom_call.1} parent=1 // pred_check
      _
    $region19: #{tpu_custom_call.1} parent=1 // pred_check_branch
      %51 = sbr.rel (0) target = $region21
    $region20: #{tpu_custom_call.1} parent=1 // pred_region
      _
    $region21: #{tpu_custom_call.1} parent=1 // pred_fallthru
      _
    // Predicated region
    $region22: #{tpu_custom_call.1} parent=1 // pred_check
      _
    $region23: #{tpu_custom_call.1} parent=1 // pred_check_branch
      %53 = sbr.rel (0) target = $region25
    $region24: #{tpu_custom_call.1} parent=1 // pred_region
      %s55 = ssub.s32 2048, 2048
      %56 = vsyncadd [#allocation9], %s55
      %s57 = sshll.u32 [#allocation8], 4
      %s58 = int_to_ptr.vmem [resolvable:$true] %s57
      %63 = dma.hbm_to_vmem [thread:$0]  %s5, 2048, %s58, [#allocation9], 128, 128, 8
    $region25: #{tpu_custom_call.1} parent=1 // pred_fallthru
      _
    // Predicated region
    $region26: #{tpu_custom_call.1} parent=1 // pred_check
      _
    $region27: #{tpu_custom_call.1} parent=1 // pred_check_branch
      %65 = sbr.rel (0) target = $region29
    $region28: #{tpu_custom_call.1} parent=1 // pred_region
      _
    $region29: #{tpu_custom_call.1} parent=1 // pred_fallthru
      _
    // Predicated region
    $region30: #{tpu_custom_call.1} parent=1 // pred_check
      _
    $region31: #{tpu_custom_call.1} parent=1 // pred_check_branch
      %67 = sbr.rel (0) target = $region33
    $region32: #{tpu_custom_call.1} parent=1 // pred_region
      %68 = dma.done [#allocation3], 128
    $region33: #{tpu_custom_call.1} parent=1 // pred_fallthru
      _
    // Predicated region
    $region34: #{tpu_custom_call.1} parent=1 // pred_check
      _
    $region35: #{tpu_custom_call.1} parent=1 // pred_check_branch
      %70 = sbr.rel (0) target = $region37
    $region36: #{tpu_custom_call.1} parent=1 // pred_region
      %71 = dma.done [#allocation6], 384
    $region37: #{tpu_custom_call.1} parent=1 // pred_fallthru
      _
    // Predicated region
    $region38: #{tpu_custom_call.1} parent=1 // pred_check
      _
    $region39: #{tpu_custom_call.1} parent=1 // pred_check_branch
      %73 = sbr.rel (0) target = $region41
    $region40: #{tpu_custom_call.1} parent=1 // pred_region
      %74 = dma.done [#allocation6], 6144
    $region41: #{tpu_custom_call.1} parent=1 // pred_fallthru
      _
    // Predicated region
    $region42: #{tpu_custom_call.1} parent=1 // pred_check
      _
    $region43: #{tpu_custom_call.1} parent=1 // pred_check_branch
      %76 = sbr.rel (0) target = $region45
    $region44: #{tpu_custom_call.1} parent=1 // pred_region
      %77 = dma.done [#allocation9], 2048
    $region45: #{tpu_custom_call.1} parent=1 // pred_fallthru
      _
    %v78 = vld [vmem:[#allocation2] sm:$0xff]
    %v79 = vld [vmem:[#allocation5] sm:$0xff]
    %v80 = vld [vmem:[#allocation5 + $0x8] sm:$0xff]
    %v81 = vld [vmem:[#allocation5 + $0x10] sm:$0xff]
    %v82 = vld [vmem:[%s2] sm:$0x7]
    %v84 = vlaneseq
    %v85 = vshrl.u32 %v84, 7
    %v86 = vsub.s32 0, %v85
    %v87 = vrot.slane %v82, %v86
    %v88 = vlaneseq
    %v89 = vshrl.u32 %v88, 7
    %v90 = vsub.s32 1, %v89
    %v91 = vrot.slane %v82, %v90
    %v92 = vlaneseq
    %v93 = vshrl.u32 %v92, 7
    %v94 = vsub.s32 2, %v93
    %v95 = vrot.slane %v82, %v94
    %vm99 = vcmask 64512
    %v101 = vsel %vm99, %v78, 0
    %103 = vmatprep.subr.mxu0 0.0
    %104 = vmatpush1.msra.mxu0 0.0
    %105 = vmatprep.subr.mxu0 0.0
    %106 = vmatpush1.msra.mxu0 0.0
    %107 = vmatprep.subr.mxu0 0.0
    %108 = vmatpush1.msra.mxu0 0.0
    %109 = vmatprep.subr.mxu0 0.0
    %110 = vmatpush1.msra.mxu0 0.0
    %111 = vmatprep.subr.mxu0 0.0
    %112 = vmatpush1.msra.mxu0 0.0
    %113 = vmatprep.subr.mxu0 0.0
    %114 = vmatpush1.msra.mxu0 0.0
    %115 = vmatprep.subr.mxu0 0.0
    %116 = vmatpush1.msra.mxu0 0.0
    %117 = vmatprep.subr.mxu0 0.0
    %118 = vmatpush1.msra.mxu0 0.0
    %119 = vmatprep.subr.mxu0 0.0
    %120 = vmatpush1.msra.mxu0 0.0
    %121 = vmatprep.subr.mxu0 0.0
    %122 = vmatpush1.msra.mxu0 0.0
    %123 = vmatprep.subr.mxu0 0.0
    %124 = vmatpush1.msra.mxu0 0.0
    %125 = vmatprep.subr.mxu0 0.0
    %126 = vmatpush1.msra.mxu0 0.0
    %127 = vmatprep.subr.mxu0 0.0
    %128 = vmatpush1.msra.mxu0 0.0
    %129 = vmatprep.subr.mxu0 0.0
    %130 = vmatpush1.msra.mxu0 0.0
    %131 = vmatprep.subr.mxu0 0.0
    %132 = vmatpush1.msra.mxu0 0.0
    %133 = vmatprep.subr.mxu0 %v80
    %134 = vmatpush1.msra.mxu0 %v79
    %135 = vmatprep.subr.mxu0 0.0
    %136 = vmatpush2.msra.mxu0 0.0
    %137 = vmatprep.subr.mxu0 0.0
    %138 = vmatpush2.msra.mxu0 0.0
    %139 = vmatprep.subr.mxu0 0.0
    %140 = vmatpush2.msra.mxu0 0.0
    %141 = vmatprep.subr.mxu0 0.0
    %142 = vmatpush2.msra.mxu0 0.0
    %143 = vmatprep.subr.mxu0 0.0
    %144 = vmatpush2.msra.mxu0 0.0
    %145 = vmatprep.subr.mxu0 0.0
    %146 = vmatpush2.msra.mxu0 0.0
    %147 = vmatprep.subr.mxu0 0.0
    %148 = vmatpush2.msra.mxu0 0.0
    %149 = vmatprep.subr.mxu0 0.0
    %150 = vmatpush2.msra.mxu0 0.0
    %151 = vmatprep.subr.mxu0 0.0
    %152 = vmatpush2.msra.mxu0 0.0
    %153 = vmatprep.subr.mxu0 0.0
    %154 = vmatpush2.msra.mxu0 0.0
    %155 = vmatprep.subr.mxu0 0.0
    %156 = vmatpush2.msra.mxu0 0.0
    %157 = vmatprep.subr.mxu0 0.0
    %158 = vmatpush2.msra.mxu0 0.0
    %159 = vmatprep.subr.mxu0 0.0
    %160 = vmatpush2.msra.mxu0 0.0
    %161 = vmatprep.subr.mxu0 0.0
    %162 = vmatpush2.msra.mxu0 0.0
    %163 = vmatprep.subr.mxu0 0.0
    %164 = vmatpush2.msra.mxu0 0.0
    %165 = vmatprep.subr.mxu0 0.0
    %166 = vmatpush2.msra.mxu0 0.0
    %167 = vmatprep.mubr.f32.mxu0 0.0
    %168 = vmatmul.mubr.f32.gmra.mxu0 %v101
    %v169 = vpop.f32.mrf.mxu0
    %v170 = vadd.f32 %v87, %v169
    %v171 = vpop.f32.mrf.mxu0
    %v172 = vadd.f32 %v91, %v171
    %173 = vdwg.mxu0
    %174 = vmatprep.subr.mxu0 0.0
    %175 = vmatpush1.msra.mxu0 0.0
    %176 = vmatprep.subr.mxu0 0.0
    %177 = vmatpush1.msra.mxu0 0.0
    %178 = vmatprep.subr.mxu0 0.0
    %179 = vmatpush1.msra.mxu0 0.0
    %180 = vmatprep.subr.mxu0 0.0
    %181 = vmatpush1.msra.mxu0 0.0
    %182 = vmatprep.subr.mxu0 0.0
    %183 = vmatpush1.msra.mxu0 0.0
    %184 = vmatprep.subr.mxu0 0.0
    %185 = vmatpush1.msra.mxu0 0.0
    %186 = vmatprep.subr.mxu0 0.0
    %187 = vmatpush1.msra.mxu0 0.0
    %188 = vmatprep.subr.mxu0 0.0
    %189 = vmatpush1.msra.mxu0 0.0
    %190 = vmatprep.subr.mxu0 0.0
    %191 = vmatpush1.msra.mxu0 0.0
    %192 = vmatprep.subr.mxu0 0.0
    %193 = vmatpush1.msra.mxu0 0.0
    %194 = vmatprep.subr.mxu0 0.0
    %195 = vmatpush1.msra.mxu0 0.0
    %196 = vmatprep.subr.mxu0 0.0
    %197 = vmatpush1.msra.mxu0 0.0
    %198 = vmatprep.subr.mxu0 0.0
    %199 = vmatpush1.msra.mxu0 0.0
    %200 = vmatprep.subr.mxu0 0.0
    %201 = vmatpush1.msra.mxu0 0.0
    %202 = vmatprep.subr.mxu0 0.0
    %203 = vmatpush1.msra.mxu0 0.0
    %204 = vmatprep.subr.mxu0 0.0
    %205 = vmatpush1.msra.mxu0 %v81
    %206 = vmatprep.subr.mxu0 0.0
    %207 = vmatpush2.msra.mxu0 0.0
    %208 = vmatprep.subr.mxu0 0.0
    %209 = vmatpush2.msra.mxu0 0.0
    %210 = vmatprep.subr.mxu0 0.0
    %211 = vmatpush2.msra.mxu0 0.0
    %212 = vmatprep.subr.mxu0 0.0
    %213 = vmatpush2.msra.mxu0 0.0
    %214 = vmatprep.subr.mxu0 0.0
    %215 = vmatpush2.msra.mxu0 0.0
    %216 = vmatprep.subr.mxu0 0.0
    %217 = vmatpush2.msra.mxu0 0.0
    %218 = vmatprep.subr.mxu0 0.0
    %219 = vmatpush2.msra.mxu0 0.0
    %220 = vmatprep.subr.mxu0 0.0
    %221 = vmatpush2.msra.mxu0 0.0
    %222 = vmatprep.subr.mxu0 0.0
    %223 = vmatpush2.msra.mxu0 0.0
    %224 = vmatprep.subr.mxu0 0.0
    %225 = vmatpush2.msra.mxu0 0.0
    %226 = vmatprep.subr.mxu0 0.0
    %227 = vmatpush2.msra.mxu0 0.0
    %228 = vmatprep.subr.mxu0 0.0
    %229 = vmatpush2.msra.mxu0 0.0
    %230 = vmatprep.subr.mxu0 0.0
    %231 = vmatpush2.msra.mxu0 0.0
    %232 = vmatprep.subr.mxu0 0.0
    %233 = vmatpush2.msra.mxu0 0.0
    %234 = vmatprep.subr.mxu0 0.0
    %235 = vmatpush2.msra.mxu0 0.0
    %236 = vmatprep.subr.mxu0 0.0
    %237 = vmatpush2.msra.mxu0 0.0
    %238 = vmatprep.mubr.f32.mxu0 0.0
    %239 = vmatmul.mubr.f32.gmra.mxu0 %v101
    %v240 = vpop.f32.mrf.mxu0
    %v241 = vadd.f32 %v95, %v240
    %v242 = vpop.f32.mrf.mxu0
    %243 = vdwg.mxu0
    %v244 = vmax.f32 %v170, 0.0
    %v245 = vmax.f32 %v172, 0.0
    %v246 = vmax.f32 %v241, 0.0
    %v247 = vld [vmem:[#allocation7] sm:$0xff]
    %v248 = vld [vmem:[#allocation7 + $0x8] sm:$0xff]
    %v249 = vld [vmem:[#allocation7 + $0x10] sm:$0xff]
    %v250 = vld [vmem:[#allocation7 + $0x18] sm:$0xff]
    %v251 = vld [vmem:[#allocation7 + $0x20] sm:$0xff]
    %v252 = vld [vmem:[#allocation7 + $0x28] sm:$0xff]
    %v253 = vld [vmem:[#allocation7 + $0x30] sm:$0xff]
    %v254 = vld [vmem:[#allocation7 + $0x38] sm:$0xff]
    %v255 = vld [vmem:[#allocation7 + $0x40] sm:$0xff]
    %v256 = vld [vmem:[#allocation7 + $0x48] sm:$0xff]
    %v257 = vld [vmem:[#allocation7 + $0x50] sm:$0xff]
    %v258 = vld [vmem:[#allocation7 + $0x58] sm:$0xff]
    %v259 = vld [vmem:[#allocation7 + $0x60] sm:$0xff]
    %v260 = vld [vmem:[#allocation7 + $0x68] sm:$0xff]
    %v261 = vld [vmem:[#allocation7 + $0x70] sm:$0xff]
    %v262 = vld [vmem:[#allocation7 + $0x78] sm:$0xff]
    %v263 = vld [vmem:[#allocation7 + $0x80] sm:$0xff]
    %v264 = vld [vmem:[#allocation7 + $0x88] sm:$0xff]
    %v265 = vld [vmem:[#allocation7 + $0x90] sm:$0xff]
    %v266 = vld [vmem:[#allocation7 + $0x98] sm:$0xff]
    %v267 = vld [vmem:[#allocation7 + $0xa0] sm:$0xff]
    %v268 = vld [vmem:[#allocation7 + $0xa8] sm:$0xff]
    %v269 = vld [vmem:[#allocation7 + $0xb0] sm:$0xff]
    %v270 = vld [vmem:[#allocation7 + $0xb8] sm:$0xff]
    %v271 = vld [vmem:[#allocation7 + $0xc0] sm:$0xff]
    %v272 = vld [vmem:[#allocation7 + $0xc8] sm:$0xff]
    %v273 = vld [vmem:[#allocation7 + $0xd0] sm:$0xff]
    %v274 = vld [vmem:[#allocation7 + $0xd8] sm:$0xff]
    %v275 = vld [vmem:[#allocation7 + $0xe0] sm:$0xff]
    %v276 = vld [vmem:[#allocation7 + $0xe8] sm:$0xff]
    %v277 = vld [vmem:[#allocation7 + $0xf0] sm:$0xff]
    %v278 = vld [vmem:[#allocation7 + $0xf8] sm:$0xff]
    %v279 = vld [vmem:[#allocation7 + $0x100] sm:$0xff]
    %v280 = vld [vmem:[#allocation7 + $0x108] sm:$0xff]
    %v281 = vld [vmem:[#allocation7 + $0x110] sm:$0xff]
    %v282 = vld [vmem:[#allocation7 + $0x118] sm:$0xff]
    %v283 = vld [vmem:[#allocation7 + $0x120] sm:$0xff]
    %v284 = vld [vmem:[#allocation7 + $0x128] sm:$0xff]
    %v285 = vld [vmem:[#allocation7 + $0x130] sm:$0xff]
    %v286 = vld [vmem:[#allocation7 + $0x138] sm:$0xff]
    %v287 = vld [vmem:[#allocation7 + $0x140] sm:$0xff]
    %v288 = vld [vmem:[#allocation7 + $0x148] sm:$0xff]
    %v289 = vld [vmem:[#allocation7 + $0x150] sm:$0xff]
    %v290 = vld [vmem:[#allocation7 + $0x158] sm:$0xff]
    %v291 = vld [vmem:[#allocation7 + $0x160] sm:$0xff]
    %v292 = vld [vmem:[#allocation7 + $0x168] sm:$0xff]
    %v293 = vld [vmem:[#allocation7 + $0x170] sm:$0xff]
    %v294 = vld [vmem:[#allocation7 + $0x178] sm:$0xff]
    %v295 = vld [vmem:[%s4] sm:$0x1]
    %v297 = vlaneseq
    %v298 = vshrl.u32 %v297, 7
    %v299 = vsub.s32 0, %v298
    %v300 = vrot.slane %v295, %v299
    %302 = vmatprep.subr.mxu0 0.0
    %303 = vmatpush1.msra.mxu0 %v262
    %304 = vmatprep.subr.mxu0 0.0
    %305 = vmatpush1.msra.mxu0 %v261
    %306 = vmatprep.subr.mxu0 0.0
    %307 = vmatpush1.msra.mxu0 %v260
    %308 = vmatprep.subr.mxu0 0.0
    %309 = vmatpush1.msra.mxu0 %v259
    %310 = vmatprep.subr.mxu0 0.0
    %311 = vmatpush1.msra.mxu0 %v258
    %312 = vmatprep.subr.mxu0 0.0
    %313 = vmatpush1.msra.mxu0 %v257
    %314 = vmatprep.subr.mxu0 0.0
    %315 = vmatpush1.msra.mxu0 %v256
    %316 = vmatprep.subr.mxu0 0.0
    %317 = vmatpush1.msra.mxu0 %v255
    %318 = vmatprep.subr.mxu0 0.0
    %319 = vmatpush1.msra.mxu0 %v254
    %320 = vmatprep.subr.mxu0 0.0
    %321 = vmatpush1.msra.mxu0 %v253
    %322 = vmatprep.subr.mxu0 0.0
    %323 = vmatpush1.msra.mxu0 %v252
    %324 = vmatprep.subr.mxu0 0.0
    %325 = vmatpush1.msra.mxu0 %v251
    %326 = vmatprep.subr.mxu0 0.0
    %327 = vmatpush1.msra.mxu0 %v250
    %328 = vmatprep.subr.mxu0 0.0
    %329 = vmatpush1.msra.mxu0 %v249
    %330 = vmatprep.subr.mxu0 0.0
    %331 = vmatpush1.msra.mxu0 %v248
    %332 = vmatprep.subr.mxu0 0.0
    %333 = vmatpush1.msra.mxu0 %v247
    %334 = vmatprep.subr.mxu0 0.0
    %335 = vmatpush2.msra.mxu0 %v278
    %336 = vmatprep.subr.mxu0 0.0
    %337 = vmatpush2.msra.mxu0 %v277
    %338 = vmatprep.subr.mxu0 0.0
    %339 = vmatpush2.msra.mxu0 %v276
    %340 = vmatprep.subr.mxu0 0.0
    %341 = vmatpush2.msra.mxu0 %v275
    %342 = vmatprep.subr.mxu0 0.0
    %343 = vmatpush2.msra.mxu0 %v274
    %344 = vmatprep.subr.mxu0 0.0
    %345 = vmatpush2.msra.mxu0 %v273
    %346 = vmatprep.subr.mxu0 0.0
    %347 = vmatpush2.msra.mxu0 %v272
    %348 = vmatprep.subr.mxu0 0.0
    %349 = vmatpush2.msra.mxu0 %v271
    %350 = vmatprep.subr.mxu0 0.0
    %351 = vmatpush2.msra.mxu0 %v270
    %352 = vmatprep.subr.mxu0 0.0
    %353 = vmatpush2.msra.mxu0 %v269
    %354 = vmatprep.subr.mxu0 0.0
    %355 = vmatpush2.msra.mxu0 %v268
    %356 = vmatprep.subr.mxu0 0.0
    %357 = vmatpush2.msra.mxu0 %v267
    %358 = vmatprep.subr.mxu0 0.0
    %359 = vmatpush2.msra.mxu0 %v266
    %360 = vmatprep.subr.mxu0 0.0
    %361 = vmatpush2.msra.mxu0 %v265
    %362 = vmatprep.subr.mxu0 0.0
    %363 = vmatpush2.msra.mxu0 %v264
    %364 = vmatprep.subr.mxu0 0.0
    %365 = vmatpush2.msra.mxu0 %v263
    %366 = vmatprep.mubr.f32.mxu0 %v245
    %367 = vmatmul.mubr.f32.gmra.mxu0 %v244
    %v368 = vpop.f32.mrf.mxu0
    %v369 = vadd.f32 %v300, %v368
    %v370 = vpop.f32.mrf.mxu0
    %371 = vdwg.mxu0
    %372 = vmatprep.subr.mxu0 0.0
    %373 = vmatpush1.msra.mxu0 %v294
    %374 = vmatprep.subr.mxu0 0.0
    %375 = vmatpush1.msra.mxu0 %v293
    %376 = vmatprep.subr.mxu0 0.0
    %377 = vmatpush1.msra.mxu0 %v292
    %378 = vmatprep.subr.mxu0 0.0
    %379 = vmatpush1.msra.mxu0 %v291
    %380 = vmatprep.subr.mxu0 0.0
    %381 = vmatpush1.msra.mxu0 %v290
    %382 = vmatprep.subr.mxu0 0.0
    %383 = vmatpush1.msra.mxu0 %v289
    %384 = vmatprep.subr.mxu0 0.0
    %385 = vmatpush1.msra.mxu0 %v288
    %386 = vmatprep.subr.mxu0 0.0
    %387 = vmatpush1.msra.mxu0 %v287
    %388 = vmatprep.subr.mxu0 0.0
    %389 = vmatpush1.msra.mxu0 %v286
    %390 = vmatprep.subr.mxu0 0.0
    %391 = vmatpush1.msra.mxu0 %v285
    %392 = vmatprep.subr.mxu0 0.0
    %393 = vmatpush1.msra.mxu0 %v284
    %394 = vmatprep.subr.mxu0 0.0
    %395 = vmatpush1.msra.mxu0 %v283
    %396 = vmatprep.subr.mxu0 0.0
    %397 = vmatpush1.msra.mxu0 %v282
    %398 = vmatprep.subr.mxu0 0.0
    %399 = vmatpush1.msra.mxu0 %v281
    %400 = vmatprep.subr.mxu0 0.0
    %401 = vmatpush1.msra.mxu0 %v280
    %402 = vmatprep.subr.mxu0 0.0
    %403 = vmatpush1.msra.mxu0 %v279
    %404 = vmatprep.subr.mxu0 0.0
    %405 = vmatpush2.msra.mxu0 0.0
    %406 = vmatprep.subr.mxu0 0.0
    %407 = vmatpush2.msra.mxu0 0.0
    %408 = vmatprep.subr.mxu0 0.0
    %409 = vmatpush2.msra.mxu0 0.0
    %410 = vmatprep.subr.mxu0 0.0
    %411 = vmatpush2.msra.mxu0 0.0
    %412 = vmatprep.subr.mxu0 0.0
    %413 = vmatpush2.msra.mxu0 0.0
    %414 = vmatprep.subr.mxu0 0.0
    %415 = vmatpush2.msra.mxu0 0.0
    %416 = vmatprep.subr.mxu0 0.0
    %417 = vmatpush2.msra.mxu0 0.0
    %418 = vmatprep.subr.mxu0 0.0
    %419 = vmatpush2.msra.mxu0 0.0
    %420 = vmatprep.subr.mxu0 0.0
    %421 = vmatpush2.msra.mxu0 0.0
    %422 = vmatprep.subr.mxu0 0.0
    %423 = vmatpush2.msra.mxu0 0.0
    %424 = vmatprep.subr.mxu0 0.0
    %425 = vmatpush2.msra.mxu0 0.0
    %426 = vmatprep.subr.mxu0 0.0
    %427 = vmatpush2.msra.mxu0 0.0
    %428 = vmatprep.subr.mxu0 0.0
    %429 = vmatpush2.msra.mxu0 0.0
    %430 = vmatprep.subr.mxu0 0.0
    %431 = vmatpush2.msra.mxu0 0.0
    %432 = vmatprep.subr.mxu0 0.0
    %433 = vmatpush2.msra.mxu0 0.0
    %434 = vmatprep.subr.mxu0 0.0
    %435 = vmatpush2.msra.mxu0 0.0
    %436 = vmatprep.mubr.f32.mxu0 0.0
    %437 = vmatmul.mubr.f32.gmra.mxu0 %v246
    %v438 = vpop.f32.mrf.mxu0
    %v439 = vadd.f32 %v369, %v438
    %v440 = vpop.f32.mrf.mxu0
    %441 = vdwg.mxu0
    %v442 = vmax.f32 %v439, 0.0
    %v443 = vld [vmem:[#allocation8] sm:$0xff]
    %v444 = vld [vmem:[#allocation8 + $0x8] sm:$0xff]
    %v445 = vld [vmem:[#allocation8 + $0x10] sm:$0xff]
    %v446 = vld [vmem:[#allocation8 + $0x18] sm:$0xff]
    %v447 = vld [vmem:[#allocation8 + $0x20] sm:$0xff]
    %v448 = vld [vmem:[#allocation8 + $0x28] sm:$0xff]
    %v449 = vld [vmem:[#allocation8 + $0x30] sm:$0xff]
    %v450 = vld [vmem:[#allocation8 + $0x38] sm:$0xff]
    %v451 = vld [vmem:[#allocation8 + $0x40] sm:$0xff]
    %v452 = vld [vmem:[#allocation8 + $0x48] sm:$0xff]
    %v453 = vld [vmem:[#allocation8 + $0x50] sm:$0xff]
    %v454 = vld [vmem:[#allocation8 + $0x58] sm:$0xff]
    %v455 = vld [vmem:[#allocation8 + $0x60] sm:$0xff]
    %v456 = vld [vmem:[#allocation8 + $0x68] sm:$0xff]
    %v457 = vld [vmem:[#allocation8 + $0x70] sm:$0xff]
    %v458 = vld [vmem:[#allocation8 + $0x78] sm:$0xff]
    %v459 = vld [vmem:[%s6] sm:$0x1]
    %v461 = vlaneseq
    %v462 = vshrl.u32 %v461, 7
    %v463 = vsub.s32 0, %v462
    %v464 = vrot.slane %v459, %v463
    %466 = vmatprep.subr.mxu0 0.0
    %467 = vmatpush1.msra.mxu0 %v458
    %468 = vmatprep.subr.mxu0 0.0
    %469 = vmatpush1.msra.mxu0 %v457
    %470 = vmatprep.subr.mxu0 0.0
    %471 = vmatpush1.msra.mxu0 %v456
    %472 = vmatprep.subr.mxu0 0.0
    %473 = vmatpush1.msra.mxu0 %v455
    %474 = vmatprep.subr.mxu0 0.0
    %475 = vmatpush1.msra.mxu0 %v454
    %476 = vmatprep.subr.mxu0 0.0
    %477 = vmatpush1.msra.mxu0 %v453
    %478 = vmatprep.subr.mxu0 0.0
    %479 = vmatpush1.msra.mxu0 %v452
    %480 = vmatprep.subr.mxu0 0.0
    %481 = vmatpush1.msra.mxu0 %v451
    %482 = vmatprep.subr.mxu0 0.0
    %483 = vmatpush1.msra.mxu0 %v450
    %484 = vmatprep.subr.mxu0 0.0
    %485 = vmatpush1.msra.mxu0 %v449
    %486 = vmatprep.subr.mxu0 0.0
    %487 = vmatpush1.msra.mxu0 %v448
    %488 = vmatprep.subr.mxu0 0.0
    %489 = vmatpush1.msra.mxu0 %v447
    %490 = vmatprep.subr.mxu0 0.0
    %491 = vmatpush1.msra.mxu0 %v446
    %492 = vmatprep.subr.mxu0 0.0
    %493 = vmatpush1.msra.mxu0 %v445
    %494 = vmatprep.subr.mxu0 0.0
    %495 = vmatpush1.msra.mxu0 %v444
    %496 = vmatprep.subr.mxu0 0.0
    %497 = vmatpush1.msra.mxu0 %v443
    %498 = vmatprep.subr.mxu0 0.0
    %499 = vmatpush2.msra.mxu0 0.0
    %500 = vmatprep.subr.mxu0 0.0
    %501 = vmatpush2.msra.mxu0 0.0
    %502 = vmatprep.subr.mxu0 0.0
    %503 = vmatpush2.msra.mxu0 0.0
    %504 = vmatprep.subr.mxu0 0.0
    %505 = vmatpush2.msra.mxu0 0.0
    %506 = vmatprep.subr.mxu0 0.0
    %507 = vmatpush2.msra.mxu0 0.0
    %508 = vmatprep.subr.mxu0 0.0
    %509 = vmatpush2.msra.mxu0 0.0
    %510 = vmatprep.subr.mxu0 0.0
    %511 = vmatpush2.msra.mxu0 0.0
    %512 = vmatprep.subr.mxu0 0.0
    %513 = vmatpush2.msra.mxu0 0.0
    %514 = vmatprep.subr.mxu0 0.0
    %515 = vmatpush2.msra.mxu0 0.0
    %516 = vmatprep.subr.mxu0 0.0
    %517 = vmatpush2.msra.mxu0 0.0
    %518 = vmatprep.subr.mxu0 0.0
    %519 = vmatpush2.msra.mxu0 0.0
    %520 = vmatprep.subr.mxu0 0.0
    %521 = vmatpush2.msra.mxu0 0.0
    %522 = vmatprep.subr.mxu0 0.0
    %523 = vmatpush2.msra.mxu0 0.0
    %524 = vmatprep.subr.mxu0 0.0
    %525 = vmatpush2.msra.mxu0 0.0
    %526 = vmatprep.subr.mxu0 0.0
    %527 = vmatpush2.msra.mxu0 0.0
    %528 = vmatprep.subr.mxu0 0.0
    %529 = vmatpush2.msra.mxu0 0.0
    %530 = vmatprep.mubr.f32.mxu0 0.0
    %531 = vmatmul.mubr.f32.gmra.mxu0 %v442
    %v532 = vpop.f32.mrf.mxu0
    %v533 = vadd.f32 %v464, %v532
    %v534 = vpop.f32.mrf.mxu0
    %535 = vdwg.mxu0
    %536 = vst [vmem:[#allocation10] sm:$0xff] %v533
    // Predicated region
    $region46: #{tpu_custom_call.1} parent=1 // pred_check
      _
    $region47: #{tpu_custom_call.1} parent=1 // pred_check_branch
      %538 = sbr.rel (0) target = $region49
    $region48: #{tpu_custom_call.1} parent=1 // pred_region
      %s540 = ssub.s32 128, 128
      %541 = vsyncadd [#allocation4], %s540
      %s543 = sshll.u32 [#allocation10], 4
      %s544 = int_to_ptr.vmem [resolvable:$true] %s543
      %546 = dma.vmem_to_hbm [thread:$0]  %s544, 128, %s7, [#allocation4]
    $region49: #{tpu_custom_call.1} parent=1 // pred_fallthru
      _
    // Predicated region
    $region50: #{tpu_custom_call.1} parent=1 // pred_check
      _
    $region51: #{tpu_custom_call.1} parent=1 // pred_check_branch
      %548 = sbr.rel (0) target = $region53
    $region52: #{tpu_custom_call.1} parent=1 // pred_region
      %549 = dma.done [#allocation4], 128
    $region53: #{tpu_custom_call.1} parent=1 // pred_fallthru
      _
    %550 = vsyncpa [#allocation3], 1
    %551 = vsyncpa [#allocation6], 1
    %552 = vsyncpa [#allocation9], 1
    %553 = vsyncpa [#allocation4], 1

</llo_original>
